<compile_context>
chip_gen: v6e
topology: v6e:2x2x1
jax: 0.10.0
libtpu: 0.0.40
codegen_flags: <defaults>
</compile_context>

<pallas_src>
import functools

import jax
import jax.numpy as jnp
from jax import lax
from jax.experimental import pallas as pl
from jax.experimental.pallas import tpu as pltpu


def _grad_loss_kernel(d_ref, out_ref, *, plane_w, pack):
    """One grid step = `b` plane-groups, each a full (H, pack*W) slab of
    d = sr - hr (f32).  Applies the 3x3 Sobel-X / Sobel-Y stencils with
    zero padding (like F.conv2d(..., padding=1)) using pltpu.roll (XLU) +
    boundary masks (VPU) and accumulates per-lane column sums of |gx|+|gy|.
    """
    b, h, wl = d_ref.shape

    # Narrow boundary masks, computed once (hoisted out of the loop).
    row = lax.broadcasted_iota(jnp.int32, (h, 1), 0)
    top = row == 0
    bot = row == h - 1
    col = lax.broadcasted_iota(jnp.int32, (1, wl), 1)
    if pack > 1:
        col = col % plane_w          # plane boundaries inside the lane axis
    left = col == 0
    right = col == plane_w - 1
    zero = jnp.float32(0.0)

    def body(i, acc):
        d = d_ref[i]                                                # (h, wl) f32
        # Zero-padded vertical neighbours (shifts are all non-negative).
        d_up = jnp.where(top, zero, pltpu.roll(d, shift=1, axis=0))       # d[y-1, x]
        d_dn = jnp.where(bot, zero, pltpu.roll(d, shift=h - 1, axis=0))   # d[y+1, x]
        vx = d_dn - d_up                 # vertical tap of Sobel_X = [-1, 0, 1]^T
        vy = d_up + 2.0 * d + d_dn       # vertical tap of Sobel_Y = [ 1, 2, 1]^T
        # Zero-padded horizontal neighbours (lane rolls).
        vx_l = jnp.where(left, zero, pltpu.roll(vx, shift=1, axis=1))        # vx[y, x-1]
        vx_r = jnp.where(right, zero, pltpu.roll(vx, shift=wl - 1, axis=1))  # vx[y, x+1]
        vy_l = jnp.where(left, zero, pltpu.roll(vy, shift=1, axis=1))
        vy_r = jnp.where(right, zero, pltpu.roll(vy, shift=wl - 1, axis=1))
        gx = vx_l + 2.0 * vx + vx_r      # == conv2d(d, sobel_X, padding=1)
        gy = vy_r - vy_l                 # == conv2d(d, sobel_Y, padding=1)
        return acc + jnp.sum(jnp.abs(gx) + jnp.abs(gy), axis=0, keepdims=True)

    acc = lax.fori_loop(0, b, body, jnp.zeros((1, wl), jnp.float32))
    out_ref[...] = acc[None]             # (1, 1, wl) per-lane partial sums


def gradient_loss(sr, hr, *, vmem_block_budget_bytes=3 * 1024 * 1024):
    """Pallas equivalent of GradientLoss.forward(sr, hr)."""
    n, c, h, w = sr.shape
    assert hr.shape == sr.shape, (sr.shape, hr.shape)
    nc = n * c

    # Linearity: conv(sr, S) - conv(hr, S) == conv(sr - hr, S).  Subtract in
    # the wrapper (after upcast to f32, matching the f32 reference) so the
    # kernel streams a single input.
    d = (sr.astype(jnp.float32) - hr.astype(jnp.float32)).reshape(nc, h, w)

    # Pack planes side by side along the lane axis when W is small so vregs /
    # stores are lane-dense.
    pack = 1 if w >= 128 else -(-128 // w)
    groups = -(-nc // pack)
    wl = pack * w

    # Batch several plane-groups per grid step (amortize ~0.35us/step) while
    # keeping the double-buffered block inside scoped VMEM; keep grid >= 2 so
    # the parallel axis can shard across both TensorCores on v7x.
    itemsize = 4  # d is f32
    group_bytes = h * wl * itemsize
    b = max(1, min(groups, vmem_block_budget_bytes // group_bytes))
    if groups >= 2:
        b = min(b, -(-groups // 2))
    grid = -(-groups // b)
    groups_pad = grid * b
    nc_pad = groups_pad * pack

    # Zero-plane padding: padded planes have d == 0 and contribute exactly 0
    # to the sum; the true n*c*h*w denominator is kept below.
    if nc_pad != nc:
        d = jnp.pad(d, ((0, nc_pad - nc), (0, 0), (0, 0)))

    # Lane-pack: (groups_pad, pack, h, w) -> (groups_pad, h, pack*w).
    # TODO(synk): when w divides 128 this transpose could be replaced by a
    # zero-copy (-1, 128) flatten with a lane-roll-by-w vertical stencil.
    d = d.reshape(groups_pad, pack, h, w)
    d = jnp.transpose(d, (0, 2, 1, 3)).reshape(groups_pad, h, wl)

    block_bytes = b * h * wl * itemsize
    vmem_limit = int(min(100 * 1024 * 1024,
                         max(16 * 1024 * 1024, 4 * block_bytes)))

    kernel = functools.partial(_grad_loss_kernel, plane_w=w, pack=pack)

    partial_sums = pl.pallas_call(
        kernel,
        out_shape=jax.ShapeDtypeStruct((grid, 1, wl), jnp.float32),
        grid_spec=pltpu.PrefetchScalarGridSpec(
            num_scalar_prefetch=0,
            grid=(grid,),
            in_specs=[pl.BlockSpec((b, h, wl), lambda i: (i, 0, 0))],
            out_specs=pl.BlockSpec((1, 1, wl), lambda i: (i, 0, 0)),
        ),
        compiler_params=pltpu.CompilerParams(
            dimension_semantics=("parallel",),   # independent per-block outputs
            vmem_limit_bytes=vmem_limit,
        ),
    )(d)

    # TODO(synk): very large planes (e.g. 4K SR) need H-strip tiling with a
    # 1-row halo to keep blocks inside v7x's 64 MiB VMEM.

    # mean|gx| + mean|gy| share the same denominator n*c*h*w.
    return jnp.sum(partial_sums) / (n * c * h * w)


def _reference_loss(sr, hr):
    """Pure-JAX reference matching the PyTorch GradientLoss module."""
    sx = jnp.array([[-1., -2., -1.], [0., 0., 0.], [1., 2., 1.]],
                   jnp.float32).reshape(1, 1, 3, 3)
    sy = jnp.array([[-1., 0., 1.], [-2., 0., 2.], [-1., 0., 1.]],
                   jnp.float32).reshape(1, 1, 3, 3)
    n, c, h, w = sr.shape
    a = sr.reshape(n * c, 1, h, w).astype(jnp.float32)
    g = hr.reshape(n * c, 1, h, w).astype(jnp.float32)

    def conv(img, k):
        return jax.lax.conv_general_dilated(
            img, k, window_strides=(1, 1), padding=((1, 1), (1, 1)),
            dimension_numbers=("NCHW", "OIHW", "NCHW"))

    ox, oy = conv(a, sx), conv(a, sy)
    gx, gy = conv(g, sx), conv(g, sy)
    return jnp.mean(jnp.abs(ox - gx)) + jnp.mean(jnp.abs(oy - gy))


if __name__ == "__main__":
    key = jax.random.PRNGKey(0)
    test_shapes = [
        (2, 4, 16, 16),    # pack=8 -> 128 lanes, single block
        (1, 3, 16, 16),    # odd N*C -> exercises zero-plane padding
        (2, 16, 16, 16),   # groups=4 -> grid=2 parallel blocks, b=2 loop
    ]
    for shape in test_shapes:
        key, k_sr, k_hr = jax.random.split(key, 3)
        sr = jax.random.normal(k_sr, shape, dtype=jnp.float32)  # super-resolved
        hr = jax.random.normal(k_hr, shape, dtype=jnp.float32)  # ground truth

        loss = jax.block_until_ready(gradient_loss(sr, hr))
        ref = _reference_loss(sr, hr)
        assert jnp.allclose(loss, ref, rtol=1e-5, atol=1e-5), (shape, loss, ref)

    print("KERNEL_OK")
</pallas_src>

<mosaic_0001>
module attributes {stable_mosaic.version = 11 : i64} {
  func.func @_grad_loss_kernel(%arg0: i32, %arg1: memref<1x16x128xf32, #tpu.memory_space<vmem>>, %arg2: memref<1x1x128xf32, #tpu.memory_space<vmem>>) attributes {dimension_semantics = [#tpu.dimension_semantics<parallel>], iteration_bounds = array<i64: 1>, scalar_prefetch = 0 : i64, scratch_operands = 0 : i64, tpu.core_type = #tpu.core_type<tc>, window_params = [{transform_indices = @transform_0, window_bounds = array<i64: 1, 16, 128>}, {transform_indices = @transform_1, window_bounds = array<i64: 1, 1, 128>}]} {
    %0 = tpu.iota {dimensions = array<i32: 0>} : vector<16x1xi32>
    %c0_i32 = arith.constant 0 : i32
    %1 = vector.broadcast %c0_i32 : i32 to vector<16x1xi32>
    %2 = arith.cmpi eq, %0, %1 : vector<16x1xi32>
    %c15_i32 = arith.constant 15 : i32
    %3 = vector.broadcast %c15_i32 : i32 to vector<16x1xi32>
    %4 = arith.cmpi eq, %0, %3 : vector<16x1xi32>
    %5 = tpu.iota {dimensions = array<i32: 1>} : vector<1x128xi32>
    %c16_i32 = arith.constant 16 : i32
    %c0_i32_0 = arith.constant 0 : i32
    %6 = arith.cmpi eq, %c16_i32, %c0_i32_0 : i32
    %c1_i32 = arith.constant 1 : i32
    %7 = arith.select %6, %c1_i32, %c16_i32 : i32
    %8 = vector.broadcast %7 : i32 to vector<1x128xi32>
    %9 = arith.remsi %5, %8 : vector<1x128xi32>
    %c0_i32_1 = arith.constant 0 : i32
    %10 = vector.broadcast %c0_i32_1 : i32 to vector<1x128xi32>
    %11 = arith.cmpi ne, %9, %10 : vector<1x128xi32>
    %c0_i32_2 = arith.constant 0 : i32
    %12 = vector.broadcast %c0_i32_2 : i32 to vector<1x128xi32>
    %13 = arith.cmpi slt, %9, %12 : vector<1x128xi32>
    %c0_i32_3 = arith.constant 0 : i32
    %14 = arith.cmpi slt, %7, %c0_i32_3 : i32
    %15 = vector.broadcast %14 : i1 to vector<1x128xi1>
    %16 = vector.broadcast %15 : vector<1x128xi1> to vector<1x128xi1>
    %17 = arith.xori %13, %16 : vector<1x128xi1>
    %18 = arith.andi %17, %11 : vector<1x128xi1>
    %19 = vector.broadcast %7 : i32 to vector<1x128xi32>
    %20 = arith.addi %9, %19 : vector<1x128xi32>
    %21 = arith.select %18, %20, %9 : vector<1x128xi1>, vector<1x128xi32>
    %c0_i32_4 = arith.constant 0 : i32
    %22 = vector.broadcast %c0_i32_4 : i32 to vector<1x128xi32>
    %23 = arith.cmpi eq, %21, %22 : vector<1x128xi32>
    %c15_i32_5 = arith.constant 15 : i32
    %24 = vector.broadcast %c15_i32_5 : i32 to vector<1x128xi32>
    %25 = arith.cmpi eq, %21, %24 : vector<1x128xi32>
    %cst = arith.constant 0.000000e+00 : f32
    %26 = vector.broadcast %cst : f32 to vector<1x128xf32>
    %cst_6 = arith.constant 0.000000e+00 : f32
    %c0_i32_7 = arith.constant 0 : i32
    %27 = arith.index_cast %c0_i32_7 : i32 to index
    %c0 = arith.constant 0 : index
    %c0_8 = arith.constant 0 : index
    %28 = vector.load %arg1[%27, %c0, %c0_8] : memref<1x16x128xf32, #tpu.memory_space<vmem>>, vector<1x16x128xf32>
    %29 = vector.shape_cast %28 : vector<1x16x128xf32> to vector<16x128xf32>
    %c1_i32_9 = arith.constant 1 : i32
    %30 = tpu.dynamic_rotate %29 by %c1_i32_9 dim 0 : vector<16x128xf32>, i32 -> vector<16x128xf32>
    %31 = vector.shape_cast %2 : vector<16x1xi1> to vector<16x1xi1>
    %32 = vector.broadcast %31 : vector<16x1xi1> to vector<16x128xi1>
    %33 = vector.broadcast %cst_6 : f32 to vector<16x128xf32>
    %34 = arith.select %32, %33, %30 : vector<16x128xi1>, vector<16x128xf32>
    %c15_i32_10 = arith.constant 15 : i32
    %35 = tpu.dynamic_rotate %29 by %c15_i32_10 dim 0 : vector<16x128xf32>, i32 -> vector<16x128xf32>
    %36 = vector.shape_cast %4 : vector<16x1xi1> to vector<16x1xi1>
    %37 = vector.broadcast %36 : vector<16x1xi1> to vector<16x128xi1>
    %38 = vector.broadcast %cst_6 : f32 to vector<16x128xf32>
    %39 = arith.select %37, %38, %35 : vector<16x128xi1>, vector<16x128xf32>
    %40 = arith.subf %39, %34 : vector<16x128xf32>
    %cst_11 = arith.constant 2.000000e+00 : f32
    %41 = vector.broadcast %cst_11 : f32 to vector<16x128xf32>
    %42 = arith.mulf %41, %29 : vector<16x128xf32>
    %43 = arith.addf %34, %42 : vector<16x128xf32>
    %44 = arith.addf %43, %39 : vector<16x128xf32>
    %c1_i32_12 = arith.constant 1 : i32
    %45 = tpu.dynamic_rotate %40 by %c1_i32_12 dim 1 : vector<16x128xf32>, i32 -> vector<16x128xf32>
    %46 = vector.shape_cast %23 : vector<1x128xi1> to vector<1x128xi1>
    %47 = vector.broadcast %46 : vector<1x128xi1> to vector<16x128xi1>
    %48 = vector.broadcast %cst_6 : f32 to vector<16x128xf32>
    %49 = arith.select %47, %48, %45 : vector<16x128xi1>, vector<16x128xf32>
    %c127_i32 = arith.constant 127 : i32
    %50 = tpu.dynamic_rotate %40 by %c127_i32 dim 1 : vector<16x128xf32>, i32 -> vector<16x128xf32>
    %51 = vector.shape_cast %25 : vector<1x128xi1> to vector<1x128xi1>
    %52 = vector.broadcast %51 : vector<1x128xi1> to vector<16x128xi1>
    %53 = vector.broadcast %cst_6 : f32 to vector<16x128xf32>
    %54 = arith.select %52, %53, %50 : vector<16x128xi1>, vector<16x128xf32>
    %c1_i32_13 = arith.constant 1 : i32
    %55 = tpu.dynamic_rotate %44 by %c1_i32_13 dim 1 : vector<16x128xf32>, i32 -> vector<16x128xf32>
    %56 = vector.shape_cast %23 : vector<1x128xi1> to vector<1x128xi1>
    %57 = vector.broadcast %56 : vector<1x128xi1> to vector<16x128xi1>
    %58 = vector.broadcast %cst_6 : f32 to vector<16x128xf32>
    %59 = arith.select %57, %58, %55 : vector<16x128xi1>, vector<16x128xf32>
    %c127_i32_14 = arith.constant 127 : i32
    %60 = tpu.dynamic_rotate %44 by %c127_i32_14 dim 1 : vector<16x128xf32>, i32 -> vector<16x128xf32>
    %61 = vector.shape_cast %25 : vector<1x128xi1> to vector<1x128xi1>
    %62 = vector.broadcast %61 : vector<1x128xi1> to vector<16x128xi1>
    %63 = vector.broadcast %cst_6 : f32 to vector<16x128xf32>
    %64 = arith.select %62, %63, %60 : vector<16x128xi1>, vector<16x128xf32>
    %cst_15 = arith.constant 2.000000e+00 : f32
    %65 = vector.broadcast %cst_15 : f32 to vector<16x128xf32>
    %66 = arith.mulf %65, %40 : vector<16x128xf32>
    %67 = arith.addf %49, %66 : vector<16x128xf32>
    %68 = arith.addf %67, %54 : vector<16x128xf32>
    %69 = arith.subf %64, %59 : vector<16x128xf32>
    %70 = math.absf %68 : vector<16x128xf32>
    %71 = math.absf %69 : vector<16x128xf32>
    %72 = arith.addf %70, %71 : vector<16x128xf32>
    %cst_16 = arith.constant dense<0.000000e+00> : vector<128xf32>
    %73 = vector.multi_reduction <add>, %72, %cst_16 [0] : vector<16x128xf32> to vector<128xf32>
    %74 = vector.shape_cast %73 : vector<128xf32> to vector<1x128xf32>
    %75 = arith.addf %26, %74 : vector<1x128xf32>
    %c1_i32_17 = arith.constant 1 : i32
    %76 = vector.shape_cast %75 : vector<1x128xf32> to vector<1x1x128xf32>
    %c0_18 = arith.constant 0 : index
    %c0_19 = arith.constant 0 : index
    %c0_20 = arith.constant 0 : index
    %77 = vector.load %arg2[%c0_18, %c0_19, %c0_20] : memref<1x1x128xf32, #tpu.memory_space<vmem>>, vector<1x1x128xf32>
    tpu.vector_store %arg2[%c0_18, %c0_19, %c0_20], %76 {strides = array<i32>} : memref<1x1x128xf32, #tpu.memory_space<vmem>>, vector<1x1x128xf32>,
    return
  }
  func.func @transform_0(%arg0: i32) -> (i32, i32, i32) {
    %c0_i32 = arith.constant 0 : i32
    %c0_i32_0 = arith.constant 0 : i32
    %c0_i32_1 = arith.constant 0 : i32
    return %arg0, %c0_i32, %c0_i32_0 : i32, i32, i32
  }
  func.func @transform_1(%arg0: i32) -> (i32, i32, i32) {
    %c0_i32 = arith.constant 0 : i32
    %c0_i32_0 = arith.constant 0 : i32
    %c0_i32_1 = arith.constant 0 : i32
    return %arg0, %c0_i32, %c0_i32_0 : i32, i32, i32
  }
}

</mosaic_0001>

<llo_original>
// kernel: tpu_custom_call.1
$region0: #{tpu_custom_call.1}
  #allocation0 [shape = 'u32[]', space=smem, size = 0x4, offset = 0x4, fixed_abs, tag = 'smem constant byte address 0x4 - core index']
  #allocation1 [shape = 'u32[144,128]{1,0:T(1,128)}', space=vmem, size = 0x12000, scoped, tag = 'internal scratch']
  %s0 = inlined_call_operand.hbm [shape: f32[1,16,128], index: 0, kind: input, shape index: {}]
  %s1 = inlined_call_operand.hbm [shape: f32[1,1,128], index: 1, kind: output, shape index: {}]
  %s2 = sld [smem:[#allocation0]]
  $region18: #{tpu_custom_call.1} parent=0
    _
  %s4 = ssub.s32 1, %s2
  %s5 = scalar_select 0, %s4, %s2
  $region1: #{tpu_custom_call.1} parent=0
    #allocation2 [shape = 'u8[8192]{0}', space=vmem, size = 0x2000, scoped, tag = 'input window, operand 0, single buffered']
    #allocation3 [shape = 's32[1]{0}', space=sflag, size = 0x4, scoped, tag = 'scoped memory for tpu_custom_call.1']
    #allocation4 [shape = 's32[1]{0}', space=sflag, size = 0x4, scoped, tag = 'scoped memory for tpu_custom_call.1']
    #allocation5 [shape = 'u8[512]{0}', space=vmem, size = 0x400, scoped, tag = 'output window, operand 0, single buffered']
    %6 = vsyncpa [#allocation3], 0
    %7 = vsyncpa [#allocation4], 0
    // Predicated region
    $region2: #{tpu_custom_call.1} parent=1 // pred_check
      _
    $region3: #{tpu_custom_call.1} parent=1 // pred_check_branch
      %9 = sbr.rel (0) target = $region5
    $region4: #{tpu_custom_call.1} parent=1 // pred_region
      %s11 = ssub.s32 256, 256
      %12 = vsyncadd [#allocation3], %s11
      %s13 = sshll.u32 [#allocation2], 4
      %s14 = int_to_ptr.vmem [resolvable:$true] %s13
      %19 = dma.hbm_to_vmem [thread:$0]  %s0, 256, %s14, [#allocation3], 128, 128, 8
    $region5: #{tpu_custom_call.1} parent=1 // pred_fallthru
      _
    // Predicated region
    $region6: #{tpu_custom_call.1} parent=1 // pred_check
      _
    $region7: #{tpu_custom_call.1} parent=1 // pred_check_branch
      %21 = sbr.rel (0) target = $region9
    $region8: #{tpu_custom_call.1} parent=1 // pred_region
      %22 = dma.done [#allocation3], 256
    $region9: #{tpu_custom_call.1} parent=1 // pred_fallthru
      _
    %v23 = vlaneseq
    %v24 = vshrl.u32 %v23, 7
    %v25 = vadd.s32 %v24, 8
    %vm26 = vcmp.eq.s32.totalorder %v24, 0
    %vm27 = vcmp.eq.s32.totalorder %v25, 0
    %vm28 = vcmp.eq.s32.totalorder %v24, 15
    %vm29 = vcmp.eq.s32.totalorder %v25, 15
    %v30 = vlaneseq
    %v31 = vand.u32 %v30, 127
    %vm32 = vcmp.lt.s32.totalorder %v31, 0
    %v33 = vsub.s32 0, %v31
    %v34 = vsel %vm32, %v33, %v31
    %v35 = vshrl.u32 %v34, 4
    %v36 = vand.u32 %v34, 15
    %v37 = vsub.s32 0, %v36
    %v38 = vsel %vm32, %v37, %v36
    %vm39 = vcmp.ne.s32.totalorder %v38, 0
    %vm40 = vcmp.lt.s32.totalorder %v38, 0
    %vm41 = vmand %vm40, %vm39
    %v42 = vadd.s32 %v38, 16
    %v43 = vsel %vm41, %v42, %v38
    %vm44 = vcmp.eq.s32.totalorder %v43, 0
    %vm45 = vcmp.eq.s32.totalorder %v43, 15
    %v46 = vld [vmem:[#allocation2] sm:$0xff]
    %v47 = vld [vmem:[#allocation2 + $0x8] sm:$0xff]
    %v48 = vrot.slane %v46, 7
    %v49 = vrot.slane %v47, 7
    %vm50 = vcmp.lt.s32.totalorder %v24, 1
    %v51 = vsel %vm50, %v48, %v49
    %v52 = vsel %vm50, %v49, %v48
    %v53 = vsel %vm26, 1, 0
    %v54 = vsel %vm27, 1, 0
    %vm55 = vcmp.eq.s32.totalorder %v53, 1
    %vm56 = vcmp.eq.s32.totalorder %v54, 1
    %v57 = vsel %vm55, 0.0, %v52
    %v58 = vsel %vm56, 0.0, %v51
    %v59 = vrot.slane %v46, 1
    %v60 = vrot.slane %v47, 1
    %vm61 = vcmp.lt.s32.totalorder %v24, 7
    %v62 = vsel %vm61, %v59, %v60
    %v63 = vsel %vm61, %v60, %v59
    %v64 = vsel %vm28, 1, 0
    %v65 = vsel %vm29, 1, 0
    %vm66 = vcmp.eq.s32.totalorder %v64, 1
    %vm67 = vcmp.eq.s32.totalorder %v65, 1
    %v68 = vsel %vm66, 0.0, %v62
    %v69 = vsel %vm67, 0.0, %v63
    %v70 = vsub.f32 %v68, %v57
    %v71 = vsub.f32 %v69, %v58
    %v72 = vmul.f32 %v46, 2.0
    %v73 = vmul.f32 %v47, 2.0
    %v74 = vadd.f32 %v57, %v72
    %v75 = vadd.f32 %v58, %v73
    %v76 = vadd.f32 %v74, %v68
    %v77 = vadd.f32 %v75, %v69
    %78 = vrot.lane.b32.xlu0 %v70, 1
    %v79 = vpop.permute.xlu0 %78
    %80 = vrot.lane.b32.xlu0 %v71, 1
    %v81 = vpop.permute.xlu0 %80
    %v82 = vsel %vm44, 1, 0
    %vm83 = vcmp.eq.s32.totalorder %v82, 1
    %v84 = vsel %vm83, 0.0, %v79
    %v85 = vsel %vm83, 0.0, %v81
    %86 = vrot.lane.b32.xlu0 %v70, 127
    %v87 = vpop.permute.xlu0 %86
    %88 = vrot.lane.b32.xlu0 %v71, 127
    %v89 = vpop.permute.xlu0 %88
    %v90 = vsel %vm45, 1, 0
    %vm91 = vcmp.eq.s32.totalorder %v90, 1
    %v92 = vsel %vm91, 0.0, %v87
    %v93 = vsel %vm91, 0.0, %v89
    %94 = vrot.lane.b32.xlu0 %v76, 1
    %v95 = vpop.permute.xlu0 %94
    %96 = vrot.lane.b32.xlu0 %v77, 1
    %v97 = vpop.permute.xlu0 %96
    %v98 = vsel %vm83, 0.0, %v95
    %v99 = vsel %vm83, 0.0, %v97
    %100 = vrot.lane.b32.xlu0 %v76, 127
    %v101 = vpop.permute.xlu0 %100
    %102 = vrot.lane.b32.xlu0 %v77, 127
    %v103 = vpop.permute.xlu0 %102
    %v104 = vsel %vm91, 0.0, %v101
    %v105 = vsel %vm91, 0.0, %v103
    %v106 = vmul.f32 %v70, 2.0
    %v107 = vmul.f32 %v71, 2.0
    %v108 = vadd.f32 %v84, %v106
    %v109 = vadd.f32 %v85, %v107
    %v110 = vadd.f32 %v108, %v92
    %v111 = vadd.f32 %v109, %v93
    %v112 = vsub.f32 %v104, %v98
    %v113 = vsub.f32 %v105, %v99
    %v114 = vand.u32 2147483647, %v110
    %v115 = vand.u32 2147483647, %v111
    %v116 = vand.u32 2147483647, %v112
    %v117 = vand.u32 2147483647, %v113
    %v118 = vadd.f32 %v114, %v116
    %v119 = vadd.f32 %v115, %v117
    %v120 = vadd.f32 %v118, %v119
    %v121 = vrot.slane %v120, 4
    %v122 = vadd.f32 %v120, %v121
    %v123 = vrot.slane %v122, 2
    %v124 = vadd.f32 %v122, %v123
    %v125 = vrot.slane %v124, 1
    %v126 = vadd.f32 %v124, %v125
    %v127 = vadd.f32 %v126, 0.0
    %128 = vst [vmem:[#allocation5] sm:$0x1] %v127
    // Predicated region
    $region10: #{tpu_custom_call.1} parent=1 // pred_check
      _
    $region11: #{tpu_custom_call.1} parent=1 // pred_check_branch
      %130 = sbr.rel (0) target = $region13
    $region12: #{tpu_custom_call.1} parent=1 // pred_region
      %s132 = ssub.s32 16, 16
      %133 = vsyncadd [#allocation4], %s132
      %s135 = sshll.u32 [#allocation5], 4
      %s136 = int_to_ptr.vmem [resolvable:$true] %s135
      %138 = dma.vmem_to_hbm [thread:$0]  %s136, 16, %s1, [#allocation4]
    $region13: #{tpu_custom_call.1} parent=1 // pred_fallthru
      _
    // Predicated region
    $region14: #{tpu_custom_call.1} parent=1 // pred_check
      _
    $region15: #{tpu_custom_call.1} parent=1 // pred_check_branch
      %140 = sbr.rel (0) target = $region17
    $region16: #{tpu_custom_call.1} parent=1 // pred_region
      %141 = dma.done [#allocation4], 16
    $region17: #{tpu_custom_call.1} parent=1 // pred_fallthru
      _
    %142 = vsyncpa [#allocation3], 1
    %143 = vsyncpa [#allocation4], 1

</llo_original>
